<compile_context>
chip_gen: v7x
topology: tpu7x:2x2x1
jax: 0.10.0
libtpu: 0.0.40
codegen_flags: <defaults>
</compile_context>

<pallas_src>
import math

import jax
import jax.numpy as jnp
from jax import lax
from jax.experimental import pallas as pl
from jax.experimental.pallas import tpu as pltpu


def _round_up(v, m):
    return (v + m - 1) // m * m


def _vmem_budget_bytes():
    """~75% of this generation's physical VMEM (leaves headroom for internals)."""
    try:
        cap = int(pltpu.get_tpu_info().vmem_capacity_bytes)
    except Exception:
        cap = 64 << 20  # conservative fallback (v7x-sized)
    return cap * 3 // 4


# ----------------------------------------------------------------------------
# Kernels
# ----------------------------------------------------------------------------
def _disc_kernel_resident(x_ref, s_ref, w_ref, o_ref):
    """Whole weight resident in VMEM; one row tile per grid step."""
    s = s_ref[...]
    if s.dtype != w_ref.dtype:
        s = s.astype(w_ref.dtype)          # bf16 MXU fast path (weight pre-cast)
    # h = summary @ W on the MXU, f32 accumulation.
    h = jnp.dot(s, w_ref[...], preferred_element_type=jnp.float32)   # (tile_n, H)
    # Bilinear score per row: elementwise product on the VPU.
    prod = x_ref[...] * h                                            # (tile_n, H) f32
    # Row-reduce AND transpose to a lane-dense (1, tile_n) row in one MXU op:
    # ones(1, H) contracted against prod's H axis (exact 1.0 -> same values as a
    # plain f32 sum, result lands lane-dense for a full-width store).
    ones_h = jnp.ones((1, prod.shape[1]), dtype=jnp.float32)
    row_sums = lax.dot_general(
        ones_h, prod,
        dimension_numbers=(((1,), (1,)), ((), ())),
        preferred_element_type=jnp.float32)                          # (1, tile_n)
    o_ref[...] = row_sums[None]                                      # (1, 1, tile_n)


def _disc_kernel_ktiled(x_ref, s_ref, w_ref, o_ref, acc_ref):
    """Weight-column-tiled path: grid=(row_tiles, H//tile_k), accumulate over k."""
    k = pl.program_id(1)

    @pl.when(k == 0)
    def _():
        acc_ref[...] = jnp.zeros_like(acc_ref)

    s = s_ref[...]
    if s.dtype != w_ref.dtype:
        s = s.astype(w_ref.dtype)
    # h[:, k-block] = summary @ W[:, k-block]
    hk = jnp.dot(s, w_ref[...], preferred_element_type=jnp.float32)  # (tile_n, tile_k)
    prod = x_ref[...] * hk
    ones_k = jnp.ones((1, prod.shape[1]), dtype=jnp.float32)
    acc_ref[...] += lax.dot_general(
        ones_k, prod,
        dimension_numbers=(((1,), (1,)), ((), ())),
        preferred_element_type=jnp.float32)                          # (1, tile_n)

    @pl.when(k == pl.num_programs(1) - 1)
    def _():
        o_ref[...] = acc_ref[...][None]


# ----------------------------------------------------------------------------
# Wrapper
# ----------------------------------------------------------------------------
def discriminator_forward(x, summary, weight, *, tile_n=None, tile_k=None,
                          use_bf16_matmul=False):
    """x: (N, H), summary: (N, H), weight: (H, H) -> (N,) float32."""
    n, hd = x.shape
    assert summary.shape == (n, hd)
    assert weight.shape == (hd, hd)

    if use_bf16_matmul:
        # One-time wrapper cast: halves weight HBM traffic + VMEM residency and
        # removes per-grid-step VPU casts of the resident block.
        weight = weight.astype(jnp.bfloat16)
    w_itemsize = weight.dtype.itemsize
    weight_bytes = hd * hd * w_itemsize

    vmem_budget = _vmem_budget_bytes()

    # ---- choose resident-weight vs column-tiled weight path --------------------
    if tile_k is None and weight_bytes > vmem_budget // 3 and hd % 128 == 0:
        tk = ((vmem_budget // 3) // max(1, 2 * hd * w_itemsize)) // 128 * 128
        tk = max(128, min(tk, hd))
        while hd % tk != 0:
            tk -= 128
        tile_k = tk
    if tile_k is not None:
        assert tile_k % 128 == 0 and hd % tile_k == 0, \
            "tile_k must be a multiple of 128 that divides hidden_dim"

    # ---- row-tile sizing: ~1 MiB streaming DMA blocks ---------------------------
    if tile_n is None:
        target_bytes = 1 << 20
        tile_n = max(512, _round_up(target_bytes // (4 * hd), 8))
        tile_n = min(tile_n, _round_up(n, 8))
        # Keep >= 2 row tiles when there is enough work (v7x megacore sharding).
        if n >= 1024 and pl.cdiv(n, tile_n) < 2:
            tile_n = _round_up(pl.cdiv(n, 2), 8)
    tile_n = max(8, _round_up(tile_n, 8))

    # Shrink tile_n so double-buffered f32 x/summary streams (+ weight) fit VMEM.
    per_row_bytes = (2 * 2 * hd + 2) * 4
    w_resident = weight_bytes if tile_k is None else 2 * hd * tile_k * w_itemsize
    avail = vmem_budget - w_resident - (4 << 20)
    if avail > per_row_bytes * 8:
        tile_n = min(tile_n, max(8, (avail // per_row_bytes) // 8 * 8))

    num_tiles = pl.cdiv(n, tile_n)
    n_pad = num_tiles * tile_n

    # ---- cost estimate (bf16-aware, single resident weight fetch) ---------------
    flops = 2 * n_pad * hd * hd + 3 * n_pad * hd
    bytes_accessed = 2 * n_pad * hd * 4 + weight_bytes + n_pad * 4
    cost = pl.CostEstimate(flops=flops, transcendentals=0,
                           bytes_accessed=bytes_accessed)

    out_shape = jax.ShapeDtypeStruct((num_tiles, 1, tile_n), jnp.float32)

    if tile_k is None:
        # Resident-weight path.
        vmem_use = (2 * 2 * tile_n * hd * 4        # x + summary, double-buffered
                    + 2 * weight_bytes             # cover double-buffered fallback
                    + 2 * tile_n * 4)              # output, double-buffered
        vmem_limit = int(min(vmem_budget, max(vmem_use + (4 << 20), 32 << 20)))
        cparams = pltpu.CompilerParams(
            dimension_semantics=("parallel",),
            vmem_limit_bytes=vmem_limit,
        )

        def _resident_call(weight_spec):
            return pl.pallas_call(
                _disc_kernel_resident,
                out_shape=out_shape,
                grid_spec=pltpu.PrefetchScalarGridSpec(
                    num_scalar_prefetch=0,
                    grid=(num_tiles,),
                    in_specs=[
                        pl.BlockSpec((tile_n, hd), lambda i: (i, 0)),   # x rows
                        pl.BlockSpec((tile_n, hd), lambda i: (i, 0)),   # summary rows
                        weight_spec,                                    # resident weight
                    ],
                    out_specs=pl.BlockSpec((1, 1, tile_n), lambda i: (i, 0, 0)),
                ),
                compiler_params=cparams,
                cost_estimate=cost,
            )(x, summary, weight)

        try:
            # Single-buffer the constant-index weight block (halves its VMEM).
            out = _resident_call(
                pl.BlockSpec((hd, hd), lambda i: (0, 0),
                             pipeline_mode=pl.Buffered(1)))
        except Exception:
            # Fallback for jax builds without BlockSpec.pipeline_mode support.
            out = _resident_call(pl.BlockSpec((hd, hd), lambda i: (0, 0)))
    else:
        # Weight-column-tiled path (large H): reduction axis last, accumulator in VMEM.
        k_steps = hd // tile_k
        vmem_use = (2 * tile_n * tile_k * 4            # x (tile_n, tile_k) blocks
                    + 2 * tile_n * hd * 4              # summary (tile_n, H) blocks
                    + 2 * hd * tile_k * w_itemsize     # weight column blocks
                    + 2 * tile_n * 4                   # output
                    + tile_n * 4)                      # accumulator scratch
        vmem_limit = int(min(vmem_budget, max(vmem_use + (4 << 20), 32 << 20)))
        out = pl.pallas_call(
            _disc_kernel_ktiled,
            out_shape=out_shape,
            grid_spec=pltpu.PrefetchScalarGridSpec(
                num_scalar_prefetch=0,
                grid=(num_tiles, k_steps),
                in_specs=[
                    pl.BlockSpec((tile_n, tile_k), lambda i, k: (i, k)),  # x cols
                    pl.BlockSpec((tile_n, hd), lambda i, k: (i, 0)),      # summary rows
                    pl.BlockSpec((hd, tile_k), lambda i, k: (0, k)),      # weight cols
                ],
                out_specs=pl.BlockSpec((1, 1, tile_n), lambda i, k: (i, 0, 0)),
                scratch_shapes=[pltpu.VMEM((1, tile_n), jnp.float32)],
            ),
            compiler_params=pltpu.CompilerParams(
                dimension_semantics=("parallel", "arbitrary"),
                vmem_limit_bytes=vmem_limit,
            ),
            cost_estimate=cost,
        )(x, summary, weight)

    # Rows >= N (tail of the last partial block) are garbage by construction and
    # are sliced away here — they must never feed anything else.
    return out.reshape(n_pad)[:n]


def init_weight(key, hidden_dim):
    # Matches torch_geometric `uniform(size, tensor)`:
    #   bound = 1.0 / sqrt(size); tensor.uniform_(-bound, bound)
    bound = 1.0 / math.sqrt(hidden_dim)
    return jax.random.uniform(
        key, (hidden_dim, hidden_dim), dtype=jnp.float32,
        minval=-bound, maxval=bound,
    )


if __name__ == "__main__":
    # Case 1: shapes implied by the module (8 nodes, hidden_dim=32).
    N, H = 8, 32
    k_w, k_x, k_s = jax.random.split(jax.random.PRNGKey(0), 3)
    weight = init_weight(k_w, H)
    x = jax.random.normal(k_x, (N, H), dtype=jnp.float32)
    summary = jax.random.normal(k_s, (N, H), dtype=jnp.float32)

    out = jax.block_until_ready(discriminator_forward(x, summary, weight))
    ref = jnp.sum(x * (summary @ weight), axis=1)
    assert out.shape == (N,)
    assert jnp.allclose(out, ref, atol=1e-4, rtol=1e-4)

    # Case 2: ragged N (partial final block, no jnp.pad copy) + bf16-weight path.
    N2, H2 = 200, 64
    k_w2, k_x2, k_s2 = jax.random.split(jax.random.PRNGKey(1), 3)
    weight2 = init_weight(k_w2, H2)
    x2 = jax.random.normal(k_x2, (N2, H2), dtype=jnp.float32)
    summary2 = jax.random.normal(k_s2, (N2, H2), dtype=jnp.float32)
    ref2 = jnp.sum(x2 * (summary2 @ weight2), axis=1)

    out2 = jax.block_until_ready(
        discriminator_forward(x2, summary2, weight2, tile_n=128))
    assert out2.shape == (N2,)
    assert jnp.allclose(out2, ref2, atol=1e-3, rtol=1e-3)

    out2_bf16 = jax.block_until_ready(
        discriminator_forward(x2, summary2, weight2, tile_n=128,
                              use_bf16_matmul=True))
    assert jnp.allclose(out2_bf16, ref2, atol=0.5, rtol=0.05)

    # Case 3: force the weight-column-tiled (accumulator) path used for large H.
    N3, H3 = 200, 256
    k_w3, k_x3, k_s3 = jax.random.split(jax.random.PRNGKey(2), 3)
    weight3 = init_weight(k_w3, H3)
    x3 = jax.random.normal(k_x3, (N3, H3), dtype=jnp.float32)
    summary3 = jax.random.normal(k_s3, (N3, H3), dtype=jnp.float32)
    ref3 = jnp.sum(x3 * (summary3 @ weight3), axis=1)

    out3 = jax.block_until_ready(
        discriminator_forward(x3, summary3, weight3, tile_n=128, tile_k=128))
    assert out3.shape == (N3,)
    assert jnp.allclose(out3, ref3, atol=1e-2, rtol=1e-4)

    print("KERNEL_OK")
</pallas_src>

<mosaic_0001>
module attributes {stable_mosaic.version = 11 : i64} {
  func.func @_disc_kernel_resident(%arg0: i32, %arg1: memref<8x32xf32, #tpu.memory_space<vmem>>, %arg2: memref<8x32xf32, #tpu.memory_space<vmem>>, %arg3: memref<32x32xf32, #tpu.memory_space<vmem>>, %arg4: memref<1x1x8xf32, #tpu.memory_space<vmem>>) attributes {dimension_semantics = [#tpu.dimension_semantics<parallel>], iteration_bounds = array<i64: 1>, scalar_prefetch = 0 : i64, scratch_operands = 0 : i64, tpu.core_type = #tpu.core_type<tc>, window_params = [{transform_indices = @transform_0, window_bounds = array<i64: 8, 32>}, {transform_indices = @transform_1, window_bounds = array<i64: 8, 32>}, {pipeline_mode = #tpu.pipeline_mode<synchronous>, transform_indices = @transform_2, window_bounds = array<i64: 32, 32>}, {transform_indices = @transform_3, window_bounds = array<i64: 1, 1, 8>}]} {
    %c0 = arith.constant 0 : index
    %c0_0 = arith.constant 0 : index
    %0 = vector.load %arg2[%c0, %c0_0] : memref<8x32xf32, #tpu.memory_space<vmem>>, vector<8x32xf32>
    %c0_1 = arith.constant 0 : index
    %c0_2 = arith.constant 0 : index
    %1 = vector.load %arg3[%c0_1, %c0_2] : memref<32x32xf32, #tpu.memory_space<vmem>>, vector<32x32xf32>
    %cst = arith.constant dense<0.000000e+00> : vector<8x32xf32>
    %2 = tpu.matmul %0, %1, %cst {dimension_numbers = #tpu.dot_dimension_numbers<[1], [0], [0], [1], [0, 0, 1, 1], [], []>} : vector<8x32xf32>, vector<32x32xf32>, vector<8x32xf32> -> vector<8x32xf32>
    %c0_3 = arith.constant 0 : index
    %c0_4 = arith.constant 0 : index
    %3 = vector.load %arg1[%c0_3, %c0_4] : memref<8x32xf32, #tpu.memory_space<vmem>>, vector<8x32xf32>
    %4 = arith.mulf %3, %2 : vector<8x32xf32>
    %cst_5 = arith.constant 1.000000e+00 : f32
    %5 = vector.broadcast %cst_5 : f32 to vector<1x32xf32>
    %cst_6 = arith.constant dense<0.000000e+00> : vector<1x8xf32>
    %6 = tpu.matmul %5, %4, %cst_6 {dimension_numbers = #tpu.dot_dimension_numbers<[1], [1], [0], [0], [0, 0, 1, 0], [], []>} : vector<1x32xf32>, vector<8x32xf32>, vector<1x8xf32> -> vector<1x8xf32>
    %7 = vector.shape_cast %6 : vector<1x8xf32> to vector<1x1x8xf32>
    %c0_7 = arith.constant 0 : index
    %c0_8 = arith.constant 0 : index
    %c0_9 = arith.constant 0 : index
    %8 = vector.load %arg4[%c0_7, %c0_8, %c0_9] : memref<1x1x8xf32, #tpu.memory_space<vmem>>, vector<1x1x8xf32>
    tpu.vector_store %arg4[%c0_7, %c0_8, %c0_9], %7 {strides = array<i32>} : memref<1x1x8xf32, #tpu.memory_space<vmem>>, vector<1x1x8xf32>,
    return
  }
  func.func @transform_0(%arg0: i32) -> (i32, i32) {
    %c0_i32 = arith.constant 0 : i32
    %c0_i32_0 = arith.constant 0 : i32
    return %arg0, %c0_i32 : i32, i32
  }
  func.func @transform_1(%arg0: i32) -> (i32, i32) {
    %c0_i32 = arith.constant 0 : i32
    %c0_i32_0 = arith.constant 0 : i32
    return %arg0, %c0_i32 : i32, i32
  }
  func.func @transform_2(%arg0: i32) -> (i32, i32) {
    %c0_i32 = arith.constant 0 : i32
    %c0_i32_0 = arith.constant 0 : i32
    %c0_i32_1 = arith.constant 0 : i32
    return %c0_i32, %c0_i32_0 : i32, i32
  }
  func.func @transform_3(%arg0: i32) -> (i32, i32, i32) {
    %c0_i32 = arith.constant 0 : i32
    %c0_i32_0 = arith.constant 0 : i32
    %c0_i32_1 = arith.constant 0 : i32
    return %arg0, %c0_i32, %c0_i32_0 : i32, i32, i32
  }
}

module attributes {stable_mosaic.version = 11 : i64} {
  func.func @_disc_kernel_resident(%arg0: i32, %arg1: memref<8x32xf32, #tpu.memory_space<vmem>>, %arg2: memref<8x32xf32, #tpu.memory_space<vmem>>, %arg3: memref<32x32xf32, #tpu.memory_space<vmem>>, %arg4: memref<1x1x8xf32, #tpu.memory_space<vmem>>) attributes {dimension_semantics = [#tpu.dimension_semantics<parallel>], iteration_bounds = array<i64: 1>, scalar_prefetch = 0 : i64, scratch_operands = 0 : i64, tpu.core_type = #tpu.core_type<tc>, window_params = [{transform_indices = @transform_0, window_bounds = array<i64: 8, 32>}, {transform_indices = @transform_1, window_bounds = array<i64: 8, 32>}, {pipeline_mode = #tpu.pipeline_mode<synchronous>, transform_indices = @transform_2, window_bounds = array<i64: 32, 32>}, {transform_indices = @transform_3, window_bounds = array<i64: 1, 1, 8>}]} {
    %c0 = arith.constant 0 : index
    %c0_0 = arith.constant 0 : index
    %0 = vector.load %arg2[%c0, %c0_0] : memref<8x32xf32, #tpu.memory_space<vmem>>, vector<8x32xf32>
    %c0_1 = arith.constant 0 : index
    %c0_2 = arith.constant 0 : index
    %1 = vector.load %arg3[%c0_1, %c0_2] : memref<32x32xf32, #tpu.memory_space<vmem>>, vector<32x32xf32>
    %cst = arith.constant dense<0.000000e+00> : vector<8x32xf32>
    %2 = tpu.matmul %0, %1, %cst {dimension_numbers = #tpu.dot_dimension_numbers<[1], [0], [0], [1], [0, 0, 1, 1], [], []>} : vector<8x32xf32>, vector<32x32xf32>, vector<8x32xf32> -> vector<8x32xf32>
    %c0_3 = arith.constant 0 : index
    %c0_4 = arith.constant 0 : index
    %3 = vector.load %arg1[%c0_3, %c0_4] : memref<8x32xf32, #tpu.memory_space<vmem>>, vector<8x32xf32>
    %4 = arith.mulf %3, %2 : vector<8x32xf32>
    %cst_5 = arith.constant 1.000000e+00 : f32
    %5 = vector.broadcast %cst_5 : f32 to vector<1x32xf32>
    %cst_6 = arith.constant dense<0.000000e+00> : vector<1x8xf32>
    %6 = tpu.matmul %5, %4, %cst_6 {dimension_numbers = #tpu.dot_dimension_numbers<[1], [1], [0], [0], [0, 0, 1, 0], [], []>} : vector<1x32xf32>, vector<8x32xf32>, vector<1x8xf32> -> vector<1x8xf32>
    %7 = vector.shape_cast %6 : vector<1x8xf32> to vector<1x1x8xf32>
    %c0_7 = arith.constant 0 : index
    %c0_8 = arith.constant 0 : index
    %c0_9 = arith.constant 0 : index
    %8 = vector.load %arg4[%c0_7, %c0_8, %c0_9] : memref<1x1x8xf32, #tpu.memory_space<vmem>>, vector<1x1x8xf32>
    tpu.vector_store %arg4[%c0_7, %c0_8, %c0_9], %7 {strides = array<i32>} : memref<1x1x8xf32, #tpu.memory_space<vmem>>, vector<1x1x8xf32>,
    return
  }
  func.func @transform_0(%arg0: i32) -> (i32, i32) {
    %c0_i32 = arith.constant 0 : i32
    %c0_i32_0 = arith.constant 0 : i32
    return %arg0, %c0_i32 : i32, i32
  }
  func.func @transform_1(%arg0: i32) -> (i32, i32) {
    %c0_i32 = arith.constant 0 : i32
    %c0_i32_0 = arith.constant 0 : i32
    return %arg0, %c0_i32 : i32, i32
  }
  func.func @transform_2(%arg0: i32) -> (i32, i32) {
    %c0_i32 = arith.constant 0 : i32
    %c0_i32_0 = arith.constant 0 : i32
    %c0_i32_1 = arith.constant 0 : i32
    return %c0_i32, %c0_i32_0 : i32, i32
  }
  func.func @transform_3(%arg0: i32) -> (i32, i32, i32) {
    %c0_i32 = arith.constant 0 : i32
    %c0_i32_0 = arith.constant 0 : i32
    %c0_i32_1 = arith.constant 0 : i32
    return %arg0, %c0_i32, %c0_i32_0 : i32, i32, i32
  }
}

</mosaic_0001>

<llo_original>
// kernel: tpu_custom_call.1
$region0: #{tpu_custom_call.1}
  #allocation0 [shape = 'u32[]', space=smem, size = 0x4, offset = 0x4, fixed_abs, tag = 'smem constant byte address 0x4 - core index']
  #allocation1 [shape = 'u32[144,128]{1,0:T(1,128)}', space=vmem, size = 0x12000, scoped, tag = 'internal scratch']
  %s0 = inlined_call_operand.hbm [shape: f32[8,32], index: 0, kind: input, shape index: {}]
  %s1 = inlined_call_operand.hbm [shape: f32[8,32], index: 1, kind: input, shape index: {}]
  %s2 = inlined_call_operand.hbm [shape: f32[32,32], index: 2, kind: input, shape index: {}]
  %s3 = inlined_call_operand.hbm [shape: f32[1,1,8], index: 3, kind: output, shape index: {}]
  %s4 = sld [smem:[#allocation0]]
  $region34: #{tpu_custom_call.1} parent=0
    _
  %s6 = ssub.s32 1, %s4
  %s7 = scalar_select 0, %s6, %s4
  $region1: #{tpu_custom_call.1} parent=0
    #allocation2 [shape = 'u8[4096]{0}', space=vmem, size = 0x1000, scoped, tag = 'input window, operand 0, single buffered']
    #allocation3 [shape = 's32[1]{0}', space=sflag, size = 0x4, scoped, tag = 'scoped memory for tpu_custom_call.1']
    #allocation4 [shape = 's32[1]{0}', space=sflag, size = 0x4, scoped, tag = 'scoped memory for tpu_custom_call.1']
    #allocation5 [shape = 'u8[4096]{0}', space=vmem, size = 0x1000, scoped, tag = 'input window, operand 1, single buffered']
    #allocation6 [shape = 's32[1]{0}', space=sflag, size = 0x4, scoped, tag = 'scoped memory for tpu_custom_call.1']
    #allocation7 [shape = 'u8[16384]{0}', space=vmem, size = 0x4000, scoped, tag = 'input window, operand 2, single buffered']
    #allocation8 [shape = 'u8[512]{0}', space=vmem, size = 0x400, scoped, tag = 'output window, operand 0, single buffered']
    %8 = vsyncpa [#allocation3], 0
    %9 = vsyncpa [#allocation6], 0
    %10 = vsyncpa [#allocation4], 0
    // Predicated region
    $region2: #{tpu_custom_call.1} parent=1 // pred_check
      _
    $region3: #{tpu_custom_call.1} parent=1 // pred_check_branch
      %12 = sbr.rel (0) target = $region5
    $region4: #{tpu_custom_call.1} parent=1 // pred_region
      %s14 = ssub.s32 128, 128
      %15 = vsyncadd [#allocation3], %s14
      %s17 = sshll.u32 [#allocation2], 4
      %s18 = int_to_ptr.vmem [resolvable:$true] %s17
      %20 = dma.hbm_to_vmem [thread:$0]  %s0, 128, %s18, [#allocation3]
    $region5: #{tpu_custom_call.1} parent=1 // pred_fallthru
      _
    // Predicated region
    $region6: #{tpu_custom_call.1} parent=1 // pred_check
      _
    $region7: #{tpu_custom_call.1} parent=1 // pred_check_branch
      %22 = sbr.rel (0) target = $region9
    $region8: #{tpu_custom_call.1} parent=1 // pred_region
      %s24 = ssub.s32 128, 128
      %25 = vsyncadd [#allocation6], %s24
      %s27 = sshll.u32 [#allocation5], 4
      %s28 = int_to_ptr.vmem [resolvable:$true] %s27
      %30 = dma.hbm_to_vmem [thread:$0]  %s1, 128, %s28, [#allocation6]
    $region9: #{tpu_custom_call.1} parent=1 // pred_fallthru
      _
    // Predicated region
    $region10: #{tpu_custom_call.1} parent=1 // pred_check
      _
    $region11: #{tpu_custom_call.1} parent=1 // pred_check_branch
      %32 = sbr.rel (0) target = $region13
    $region12: #{tpu_custom_call.1} parent=1 // pred_region
      %s34 = ssub.s32 512, 512
      %35 = vsyncadd [#allocation6], %s34
      %s36 = sshll.u32 [#allocation7], 4
      %s37 = int_to_ptr.vmem [resolvable:$true] %s36
      %42 = dma.hbm_to_vmem [thread:$0]  %s2, 512, %s37, [#allocation6], 128, 128, 8
    $region13: #{tpu_custom_call.1} parent=1 // pred_fallthru
      _
    // Predicated region
    $region14: #{tpu_custom_call.1} parent=1 // pred_check
      _
    $region15: #{tpu_custom_call.1} parent=1 // pred_check_branch
      %44 = sbr.rel (0) target = $region17
    $region16: #{tpu_custom_call.1} parent=1 // pred_region
      %45 = dma.done [#allocation3], 128
    $region17: #{tpu_custom_call.1} parent=1 // pred_fallthru
      _
    // Predicated region
    $region18: #{tpu_custom_call.1} parent=1 // pred_check
      _
    $region19: #{tpu_custom_call.1} parent=1 // pred_check_branch
      %47 = sbr.rel (0) target = $region21
    $region20: #{tpu_custom_call.1} parent=1 // pred_region
      %48 = dma.done [#allocation6], 128
    $region21: #{tpu_custom_call.1} parent=1 // pred_fallthru
      _
    // Predicated region
    $region22: #{tpu_custom_call.1} parent=1 // pred_check
      _
    $region23: #{tpu_custom_call.1} parent=1 // pred_check_branch
      %50 = sbr.rel (0) target = $region25
    $region24: #{tpu_custom_call.1} parent=1 // pred_region
      %51 = dma.done [#allocation6], 512
    $region25: #{tpu_custom_call.1} parent=1 // pred_fallthru
      _
    %v52 = vld [vmem:[#allocation5] sm:$0xff]
    %v53 = vld [vmem:[#allocation7] sm:$0xff]
    %v54 = vld [vmem:[#allocation7 + $0x8] sm:$0xff]
    %v55 = vld [vmem:[#allocation7 + $0x10] sm:$0xff]
    %v56 = vld [vmem:[#allocation7 + $0x18] sm:$0xff]
    %vm57 = vcmask 261120
    %v59 = vsel %vm57, %v52, 0
    %61 = vmatprep.subr.mxu0 0.0
    %62 = vmatpush1.msra.mxu0 %v53
    %63 = vmatprep.subr.mxu0 0.0
    %64 = vmatpush1.msra.mxu0 %v54
    %65 = vmatprep.subr.mxu0 0.0
    %66 = vmatpush1.msra.mxu0 %v55
    %67 = vmatprep.subr.mxu0 0.0
    %68 = vmatpush1.msra.mxu0 %v56
    %69 = vmatprep.subr.mxu0 0.0
    %70 = vmatpush1.msra.mxu0 0.0
    %71 = vmatprep.subr.mxu0 0.0
    %72 = vmatpush1.msra.mxu0 0.0
    %73 = vmatprep.subr.mxu0 0.0
    %74 = vmatpush1.msra.mxu0 0.0
    %75 = vmatprep.subr.mxu0 0.0
    %76 = vmatpush1.msra.mxu0 0.0
    %77 = vmatprep.subr.mxu0 0.0
    %78 = vmatpush1.msra.mxu0 0.0
    %79 = vmatprep.subr.mxu0 0.0
    %80 = vmatpush1.msra.mxu0 0.0
    %81 = vmatprep.subr.mxu0 0.0
    %82 = vmatpush1.msra.mxu0 0.0
    %83 = vmatprep.subr.mxu0 0.0
    %84 = vmatpush1.msra.mxu0 0.0
    %85 = vmatprep.subr.mxu0 0.0
    %86 = vmatpush1.msra.mxu0 0.0
    %87 = vmatprep.subr.mxu0 0.0
    %88 = vmatpush1.msra.mxu0 0.0
    %89 = vmatprep.subr.mxu0 0.0
    %90 = vmatpush1.msra.mxu0 0.0
    %91 = vmatprep.subr.mxu0 0.0
    %92 = vmatpush1.msra.mxu0 0.0
    %93 = vmatprep.subr.mxu0 0.0
    %94 = vmatpush1.msra.mxu0 0.0
    %95 = vmatprep.subr.mxu0 0.0
    %96 = vmatpush1.msra.mxu0 0.0
    %97 = vmatprep.subr.mxu0 0.0
    %98 = vmatpush1.msra.mxu0 0.0
    %99 = vmatprep.subr.mxu0 0.0
    %100 = vmatpush1.msra.mxu0 0.0
    %101 = vmatprep.subr.mxu0 0.0
    %102 = vmatpush1.msra.mxu0 0.0
    %103 = vmatprep.subr.mxu0 0.0
    %104 = vmatpush1.msra.mxu0 0.0
    %105 = vmatprep.subr.mxu0 0.0
    %106 = vmatpush1.msra.mxu0 0.0
    %107 = vmatprep.subr.mxu0 0.0
    %108 = vmatpush1.msra.mxu0 0.0
    %109 = vmatprep.subr.mxu0 0.0
    %110 = vmatpush1.msra.mxu0 0.0
    %111 = vmatprep.subr.mxu0 0.0
    %112 = vmatpush1.msra.mxu0 0.0
    %113 = vmatprep.subr.mxu0 0.0
    %114 = vmatpush1.msra.mxu0 0.0
    %115 = vmatprep.subr.mxu0 0.0
    %116 = vmatpush1.msra.mxu0 0.0
    %117 = vmatprep.subr.mxu0 0.0
    %118 = vmatpush1.msra.mxu0 0.0
    %119 = vmatprep.subr.mxu0 0.0
    %120 = vmatpush1.msra.mxu0 0.0
    %121 = vmatprep.subr.mxu0 0.0
    %122 = vmatpush1.msra.mxu0 0.0
    %123 = vmatprep.subr.mxu0 0.0
    %124 = vmatpush1.msra.mxu0 0.0
    %125 = vmatprep.mubr.f32.mxu0 0.0
    %126 = vmatmul.mubr.f32.gmra.mrb[0].mxu0 %v59
    %v127 = vpop.f32.mrb[0].mxu0
    %v128 = vadd.f32 0.0, %v127
    %v129 = vpop.f32.mrb[0].mxu0
    %130 = vdwg.mxu0
    %v131 = vld [vmem:[#allocation2] sm:$0xff]
    %v132 = vmul.f32 %v131, %v128
    %v134 = vsel %vm57, 1.0, 0
    %v137 = vsel %vm57, %v132, 0
    %139 = vmatprep.subr.mxu0 0.0
    %140 = vmatpush1.xpose.msra.mxu0 %v137
    %141 = vmatprep.subr.mxu0 0.0
    %142 = vmatpush1.xpose.msra.mxu0 0.0
    %143 = vmatprep.subr.mxu0 0.0
    %144 = vmatpush1.xpose.msra.mxu0 0.0
    %145 = vmatprep.subr.mxu0 0.0
    %146 = vmatpush1.xpose.msra.mxu0 0.0
    %147 = vmatprep.subr.mxu0 0.0
    %148 = vmatpush1.xpose.msra.mxu0 0.0
    %149 = vmatprep.subr.mxu0 0.0
    %150 = vmatpush1.xpose.msra.mxu0 0.0
    %151 = vmatprep.subr.mxu0 0.0
    %152 = vmatpush1.xpose.msra.mxu0 0.0
    %153 = vmatprep.subr.mxu0 0.0
    %154 = vmatpush1.xpose.msra.mxu0 0.0
    %155 = vmatprep.subr.mxu0 0.0
    %156 = vmatpush1.xpose.msra.mxu0 0.0
    %157 = vmatprep.subr.mxu0 0.0
    %158 = vmatpush1.xpose.msra.mxu0 0.0
    %159 = vmatprep.subr.mxu0 0.0
    %160 = vmatpush1.xpose.msra.mxu0 0.0
    %161 = vmatprep.subr.mxu0 0.0
    %162 = vmatpush1.xpose.msra.mxu0 0.0
    %163 = vmatprep.subr.mxu0 0.0
    %164 = vmatpush1.xpose.msra.mxu0 0.0
    %165 = vmatprep.subr.mxu0 0.0
    %166 = vmatpush1.xpose.msra.mxu0 0.0
    %167 = vmatprep.subr.mxu0 0.0
    %168 = vmatpush1.xpose.msra.mxu0 0.0
    %169 = vmatprep.subr.mxu0 0.0
    %170 = vmatpush1.xpose.msra.mxu0 0.0
    %171 = vmatprep.subr.mxu0 0.0
    %172 = vmatpush1.xpose.msra.mxu0 0.0
    %173 = vmatprep.subr.mxu0 0.0
    %174 = vmatpush1.xpose.msra.mxu0 0.0
    %175 = vmatprep.subr.mxu0 0.0
    %176 = vmatpush1.xpose.msra.mxu0 0.0
    %177 = vmatprep.subr.mxu0 0.0
    %178 = vmatpush1.xpose.msra.mxu0 0.0
    %179 = vmatprep.subr.mxu0 0.0
    %180 = vmatpush1.xpose.msra.mxu0 0.0
    %181 = vmatprep.subr.mxu0 0.0
    %182 = vmatpush1.xpose.msra.mxu0 0.0
    %183 = vmatprep.subr.mxu0 0.0
    %184 = vmatpush1.xpose.msra.mxu0 0.0
    %185 = vmatprep.subr.mxu0 0.0
    %186 = vmatpush1.xpose.msra.mxu0 0.0
    %187 = vmatprep.subr.mxu0 0.0
    %188 = vmatpush1.xpose.msra.mxu0 0.0
    %189 = vmatprep.subr.mxu0 0.0
    %190 = vmatpush1.xpose.msra.mxu0 0.0
    %191 = vmatprep.subr.mxu0 0.0
    %192 = vmatpush1.xpose.msra.mxu0 0.0
    %193 = vmatprep.subr.mxu0 0.0
    %194 = vmatpush1.xpose.msra.mxu0 0.0
    %195 = vmatprep.subr.mxu0 0.0
    %196 = vmatpush1.xpose.msra.mxu0 0.0
    %197 = vmatprep.subr.mxu0 0.0
    %198 = vmatpush1.xpose.msra.mxu0 0.0
    %199 = vmatprep.subr.mxu0 0.0
    %200 = vmatpush1.xpose.msra.mxu0 0.0
    %201 = vmatprep.subr.mxu0 0.0
    %202 = vmatpush1.xpose.msra.mxu0 0.0
    %203 = vmatprep.mubr.f32.mxu0 0.0
    %204 = vmatmul.mubr.f32.gmra.mrb[0].mxu0 %v134
    %v205 = vpop.f32.mrb[0].mxu0
    %v206 = vadd.f32 0.0, %v205
    %v207 = vpop.f32.mrb[0].mxu0
    %208 = vdwg.mxu0
    %vm209 = vcmask 57344
    %210 = vst.msk [vmem:[#allocation8] sm:$0x1] %vm209, %v206
    // Predicated region
    $region26: #{tpu_custom_call.1} parent=1 // pred_check
      _
    $region27: #{tpu_custom_call.1} parent=1 // pred_check_branch
      %212 = sbr.rel (0) target = $region29
    $region28: #{tpu_custom_call.1} parent=1 // pred_region
      %s214 = ssub.s32 16, 16
      %215 = vsyncadd [#allocation4], %s214
      %s217 = sshll.u32 [#allocation8], 4
      %s218 = int_to_ptr.vmem [resolvable:$true] %s217
      %220 = dma.vmem_to_hbm [thread:$0]  %s218, 16, %s3, [#allocation4]
    $region29: #{tpu_custom_call.1} parent=1 // pred_fallthru
      _
    // Predicated region
    $region30: #{tpu_custom_call.1} parent=1 // pred_check
      _
    $region31: #{tpu_custom_call.1} parent=1 // pred_check_branch
      %222 = sbr.rel (0) target = $region33
    $region32: #{tpu_custom_call.1} parent=1 // pred_region
      %223 = dma.done [#allocation4], 16
    $region33: #{tpu_custom_call.1} parent=1 // pred_fallthru
      _
    %224 = vsyncpa [#allocation3], 1
    %225 = vsyncpa [#allocation6], 1
    %226 = vsyncpa [#allocation4], 1

// kernel: tpu_custom_call.1
$region0: #{tpu_custom_call.1}
  #allocation0 [shape = 'u32[]', space=smem, size = 0x4, offset = 0x4, fixed_abs, tag = 'smem constant byte address 0x4 - core index']
  #allocation1 [shape = 'u32[144,128]{1,0:T(1,128)}', space=vmem, size = 0x12000, scoped, tag = 'internal scratch']
  %s0 = inlined_call_operand.hbm [shape: f32[8,32], index: 0, kind: input, shape index: {}]
  %s1 = inlined_call_operand.hbm [shape: f32[8,32], index: 1, kind: input, shape index: {}]
  %s2 = inlined_call_operand.hbm [shape: f32[32,32], index: 2, kind: input, shape index: {}]
  %s3 = inlined_call_operand.hbm [shape: f32[1,1,8], index: 3, kind: output, shape index: {}]
  %s4 = sld [smem:[#allocation0]]
  $region34: #{tpu_custom_call.1} parent=0
    _
  %s6 = ssub.s32 1, %s4
  %s7 = scalar_select 0, %s6, %s4
  $region1: #{tpu_custom_call.1} parent=0
    #allocation2 [shape = 'u8[4096]{0}', space=vmem, size = 0x1000, scoped, tag = 'input window, operand 0, single buffered']
    #allocation3 [shape = 's32[1]{0}', space=sflag, size = 0x4, scoped, tag = 'scoped memory for tpu_custom_call.1']
    #allocation4 [shape = 's32[1]{0}', space=sflag, size = 0x4, scoped, tag = 'scoped memory for tpu_custom_call.1']
    #allocation5 [shape = 'u8[4096]{0}', space=vmem, size = 0x1000, scoped, tag = 'input window, operand 1, single buffered']
    #allocation6 [shape = 's32[1]{0}', space=sflag, size = 0x4, scoped, tag = 'scoped memory for tpu_custom_call.1']
    #allocation7 [shape = 'u8[16384]{0}', space=vmem, size = 0x4000, scoped, tag = 'input window, operand 2, single buffered']
    #allocation8 [shape = 'u8[512]{0}', space=vmem, size = 0x400, scoped, tag = 'output window, operand 0, single buffered']
    %8 = vsyncpa [#allocation3], 0
    %9 = vsyncpa [#allocation6], 0
    %10 = vsyncpa [#allocation4], 0
    // Predicated region
    $region2: #{tpu_custom_call.1} parent=1 // pred_check
      _
    $region3: #{tpu_custom_call.1} parent=1 // pred_check_branch
      %12 = sbr.rel (0) target = $region5
    $region4: #{tpu_custom_call.1} parent=1 // pred_region
      %s14 = ssub.s32 128, 128
      %15 = vsyncadd [#allocation3], %s14
      %s17 = sshll.u32 [#allocation2], 4
      %s18 = int_to_ptr.vmem [resolvable:$true] %s17
      %20 = dma.hbm_to_vmem [thread:$0]  %s0, 128, %s18, [#allocation3]
    $region5: #{tpu_custom_call.1} parent=1 // pred_fallthru
      _
    // Predicated region
    $region6: #{tpu_custom_call.1} parent=1 // pred_check
      _
    $region7: #{tpu_custom_call.1} parent=1 // pred_check_branch
      %22 = sbr.rel (0) target = $region9
    $region8: #{tpu_custom_call.1} parent=1 // pred_region
      %s24 = ssub.s32 128, 128
      %25 = vsyncadd [#allocation6], %s24
      %s27 = sshll.u32 [#allocation5], 4
      %s28 = int_to_ptr.vmem [resolvable:$true] %s27
      %30 = dma.hbm_to_vmem [thread:$0]  %s1, 128, %s28, [#allocation6]
    $region9: #{tpu_custom_call.1} parent=1 // pred_fallthru
      _
    // Predicated region
    $region10: #{tpu_custom_call.1} parent=1 // pred_check
      _
    $region11: #{tpu_custom_call.1} parent=1 // pred_check_branch
      %32 = sbr.rel (0) target = $region13
    $region12: #{tpu_custom_call.1} parent=1 // pred_region
      %s34 = ssub.s32 512, 512
      %35 = vsyncadd [#allocation6], %s34
      %s36 = sshll.u32 [#allocation7], 4
      %s37 = int_to_ptr.vmem [resolvable:$true] %s36
      %42 = dma.hbm_to_vmem [thread:$0]  %s2, 512, %s37, [#allocation6], 128, 128, 8
    $region13: #{tpu_custom_call.1} parent=1 // pred_fallthru
      _
    // Predicated region
    $region14: #{tpu_custom_call.1} parent=1 // pred_check
      _
    $region15: #{tpu_custom_call.1} parent=1 // pred_check_branch
      %44 = sbr.rel (0) target = $region17
    $region16: #{tpu_custom_call.1} parent=1 // pred_region
      %45 = dma.done [#allocation3], 128
    $region17: #{tpu_custom_call.1} parent=1 // pred_fallthru
      _
    // Predicated region
    $region18: #{tpu_custom_call.1} parent=1 // pred_check
      _
    $region19: #{tpu_custom_call.1} parent=1 // pred_check_branch
      %47 = sbr.rel (0) target = $region21
    $region20: #{tpu_custom_call.1} parent=1 // pred_region
      %48 = dma.done [#allocation6], 128
    $region21: #{tpu_custom_call.1} parent=1 // pred_fallthru
      _
    // Predicated region
    $region22: #{tpu_custom_call.1} parent=1 // pred_check
      _
    $region23: #{tpu_custom_call.1} parent=1 // pred_check_branch
      %50 = sbr.rel (0) target = $region25
    $region24: #{tpu_custom_call.1} parent=1 // pred_region
      %51 = dma.done [#allocation6], 512
    $region25: #{tpu_custom_call.1} parent=1 // pred_fallthru
      _
    %v52 = vld [vmem:[#allocation5] sm:$0xff]
    %v53 = vld [vmem:[#allocation7] sm:$0xff]
    %v54 = vld [vmem:[#allocation7 + $0x8] sm:$0xff]
    %v55 = vld [vmem:[#allocation7 + $0x10] sm:$0xff]
    %v56 = vld [vmem:[#allocation7 + $0x18] sm:$0xff]
    %vm57 = vcmask 261120
    %v59 = vsel %vm57, %v52, 0
    %61 = vmatprep.subr.mxu0 0.0
    %62 = vmatpush1.msra.mxu0 %v53
    %63 = vmatprep.subr.mxu0 0.0
    %64 = vmatpush1.msra.mxu0 %v54
    %65 = vmatprep.subr.mxu0 0.0
    %66 = vmatpush1.msra.mxu0 %v55
    %67 = vmatprep.subr.mxu0 0.0
    %68 = vmatpush1.msra.mxu0 %v56
    %69 = vmatprep.subr.mxu0 0.0
    %70 = vmatpush1.msra.mxu0 0.0
    %71 = vmatprep.subr.mxu0 0.0
    %72 = vmatpush1.msra.mxu0 0.0
    %73 = vmatprep.subr.mxu0 0.0
    %74 = vmatpush1.msra.mxu0 0.0
    %75 = vmatprep.subr.mxu0 0.0
    %76 = vmatpush1.msra.mxu0 0.0
    %77 = vmatprep.subr.mxu0 0.0
    %78 = vmatpush1.msra.mxu0 0.0
    %79 = vmatprep.subr.mxu0 0.0
    %80 = vmatpush1.msra.mxu0 0.0
    %81 = vmatprep.subr.mxu0 0.0
    %82 = vmatpush1.msra.mxu0 0.0
    %83 = vmatprep.subr.mxu0 0.0
    %84 = vmatpush1.msra.mxu0 0.0
    %85 = vmatprep.subr.mxu0 0.0
    %86 = vmatpush1.msra.mxu0 0.0
    %87 = vmatprep.subr.mxu0 0.0
    %88 = vmatpush1.msra.mxu0 0.0
    %89 = vmatprep.subr.mxu0 0.0
    %90 = vmatpush1.msra.mxu0 0.0
    %91 = vmatprep.subr.mxu0 0.0
    %92 = vmatpush1.msra.mxu0 0.0
    %93 = vmatprep.subr.mxu0 0.0
    %94 = vmatpush1.msra.mxu0 0.0
    %95 = vmatprep.subr.mxu0 0.0
    %96 = vmatpush1.msra.mxu0 0.0
    %97 = vmatprep.subr.mxu0 0.0
    %98 = vmatpush1.msra.mxu0 0.0
    %99 = vmatprep.subr.mxu0 0.0
    %100 = vmatpush1.msra.mxu0 0.0
    %101 = vmatprep.subr.mxu0 0.0
    %102 = vmatpush1.msra.mxu0 0.0
    %103 = vmatprep.subr.mxu0 0.0
    %104 = vmatpush1.msra.mxu0 0.0
    %105 = vmatprep.subr.mxu0 0.0
    %106 = vmatpush1.msra.mxu0 0.0
    %107 = vmatprep.subr.mxu0 0.0
    %108 = vmatpush1.msra.mxu0 0.0
    %109 = vmatprep.subr.mxu0 0.0
    %110 = vmatpush1.msra.mxu0 0.0
    %111 = vmatprep.subr.mxu0 0.0
    %112 = vmatpush1.msra.mxu0 0.0
    %113 = vmatprep.subr.mxu0 0.0
    %114 = vmatpush1.msra.mxu0 0.0
    %115 = vmatprep.subr.mxu0 0.0
    %116 = vmatpush1.msra.mxu0 0.0
    %117 = vmatprep.subr.mxu0 0.0
    %118 = vmatpush1.msra.mxu0 0.0
    %119 = vmatprep.subr.mxu0 0.0
    %120 = vmatpush1.msra.mxu0 0.0
    %121 = vmatprep.subr.mxu0 0.0
    %122 = vmatpush1.msra.mxu0 0.0
    %123 = vmatprep.subr.mxu0 0.0
    %124 = vmatpush1.msra.mxu0 0.0
    %125 = vmatprep.mubr.f32.mxu0 0.0
    %126 = vmatmul.mubr.f32.gmra.mrb[0].mxu0 %v59
    %v127 = vpop.f32.mrb[0].mxu0
    %v128 = vadd.f32 0.0, %v127
    %v129 = vpop.f32.mrb[0].mxu0
    %130 = vdwg.mxu0
    %v131 = vld [vmem:[#allocation2] sm:$0xff]
    %v132 = vmul.f32 %v131, %v128
    %v134 = vsel %vm57, 1.0, 0
    %v137 = vsel %vm57, %v132, 0
    %139 = vmatprep.subr.mxu0 0.0
    %140 = vmatpush1.xpose.msra.mxu0 %v137
    %141 = vmatprep.subr.mxu0 0.0
    %142 = vmatpush1.xpose.msra.mxu0 0.0
    %143 = vmatprep.subr.mxu0 0.0
    %144 = vmatpush1.xpose.msra.mxu0 0.0
    %145 = vmatprep.subr.mxu0 0.0
    %146 = vmatpush1.xpose.msra.mxu0 0.0
    %147 = vmatprep.subr.mxu0 0.0
    %148 = vmatpush1.xpose.msra.mxu0 0.0
    %149 = vmatprep.subr.mxu0 0.0
    %150 = vmatpush1.xpose.msra.mxu0 0.0
    %151 = vmatprep.subr.mxu0 0.0
    %152 = vmatpush1.xpose.msra.mxu0 0.0
    %153 = vmatprep.subr.mxu0 0.0
    %154 = vmatpush1.xpose.msra.mxu0 0.0
    %155 = vmatprep.subr.mxu0 0.0
    %156 = vmatpush1.xpose.msra.mxu0 0.0
    %157 = vmatprep.subr.mxu0 0.0
    %158 = vmatpush1.xpose.msra.mxu0 0.0
    %159 = vmatprep.subr.mxu0 0.0
    %160 = vmatpush1.xpose.msra.mxu0 0.0
    %161 = vmatprep.subr.mxu0 0.0
    %162 = vmatpush1.xpose.msra.mxu0 0.0
    %163 = vmatprep.subr.mxu0 0.0
    %164 = vmatpush1.xpose.msra.mxu0 0.0
    %165 = vmatprep.subr.mxu0 0.0
    %166 = vmatpush1.xpose.msra.mxu0 0.0
    %167 = vmatprep.subr.mxu0 0.0
    %168 = vmatpush1.xpose.msra.mxu0 0.0
    %169 = vmatprep.subr.mxu0 0.0
    %170 = vmatpush1.xpose.msra.mxu0 0.0
    %171 = vmatprep.subr.mxu0 0.0
    %172 = vmatpush1.xpose.msra.mxu0 0.0
    %173 = vmatprep.subr.mxu0 0.0
    %174 = vmatpush1.xpose.msra.mxu0 0.0
    %175 = vmatprep.subr.mxu0 0.0
    %176 = vmatpush1.xpose.msra.mxu0 0.0
    %177 = vmatprep.subr.mxu0 0.0
    %178 = vmatpush1.xpose.msra.mxu0 0.0
    %179 = vmatprep.subr.mxu0 0.0
    %180 = vmatpush1.xpose.msra.mxu0 0.0
    %181 = vmatprep.subr.mxu0 0.0
    %182 = vmatpush1.xpose.msra.mxu0 0.0
    %183 = vmatprep.subr.mxu0 0.0
    %184 = vmatpush1.xpose.msra.mxu0 0.0
    %185 = vmatprep.subr.mxu0 0.0
    %186 = vmatpush1.xpose.msra.mxu0 0.0
    %187 = vmatprep.subr.mxu0 0.0
    %188 = vmatpush1.xpose.msra.mxu0 0.0
    %189 = vmatprep.subr.mxu0 0.0
    %190 = vmatpush1.xpose.msra.mxu0 0.0
    %191 = vmatprep.subr.mxu0 0.0
    %192 = vmatpush1.xpose.msra.mxu0 0.0
    %193 = vmatprep.subr.mxu0 0.0
    %194 = vmatpush1.xpose.msra.mxu0 0.0
    %195 = vmatprep.subr.mxu0 0.0
    %196 = vmatpush1.xpose.msra.mxu0 0.0
    %197 = vmatprep.subr.mxu0 0.0
    %198 = vmatpush1.xpose.msra.mxu0 0.0
    %199 = vmatprep.subr.mxu0 0.0
    %200 = vmatpush1.xpose.msra.mxu0 0.0
    %201 = vmatprep.subr.mxu0 0.0
    %202 = vmatpush1.xpose.msra.mxu0 0.0
    %203 = vmatprep.mubr.f32.mxu0 0.0
    %204 = vmatmul.mubr.f32.gmra.mrb[0].mxu0 %v134
    %v205 = vpop.f32.mrb[0].mxu0
    %v206 = vadd.f32 0.0, %v205
    %v207 = vpop.f32.mrb[0].mxu0
    %208 = vdwg.mxu0
    %vm209 = vcmask 57344
    %210 = vst.msk [vmem:[#allocation8] sm:$0x1] %vm209, %v206
    // Predicated region
    $region26: #{tpu_custom_call.1} parent=1 // pred_check
      _
    $region27: #{tpu_custom_call.1} parent=1 // pred_check_branch
      %212 = sbr.rel (0) target = $region29
    $region28: #{tpu_custom_call.1} parent=1 // pred_region
      %s214 = ssub.s32 16, 16
      %215 = vsyncadd [#allocation4], %s214
      %s217 = sshll.u32 [#allocation8], 4
      %s218 = int_to_ptr.vmem [resolvable:$true] %s217
      %220 = dma.vmem_to_hbm [thread:$0]  %s218, 16, %s3, [#allocation4]
    $region29: #{tpu_custom_call.1} parent=1 // pred_fallthru
      _
    // Predicated region
    $region30: #{tpu_custom_call.1} parent=1 // pred_check
      _
    $region31: #{tpu_custom_call.1} parent=1 // pred_check_branch
      %222 = sbr.rel (0) target = $region33
    $region32: #{tpu_custom_call.1} parent=1 // pred_region
      %223 = dma.done [#allocation4], 16
    $region33: #{tpu_custom_call.1} parent=1 // pred_fallthru
      _
    %224 = vsyncpa [#allocation3], 1
    %225 = vsyncpa [#allocation6], 1
    %226 = vsyncpa [#allocation4], 1

</llo_original>
